<compile_context>
chip_gen: v7x
topology: tpu7x:2x2x1
jax: 0.10.0
libtpu: 0.0.40
codegen_flags: <defaults>
</compile_context>

<pallas_src>
import functools
import math

import jax
import jax.numpy as jnp
from jax.experimental import pallas as pl
from jax.experimental.pallas import tpu as pltpu

_LANE = 128     # hidden feature dims padded to lane multiples (VMEM-resident)
_SUBLANE = 8    # batch tile must be a multiple of the sublane count


def _round_up(n: int, m: int) -> int:
    return ((n + m - 1) // m) * m


def _mlp_kernel(n_hidden: int, mxu_dtype, *refs):
    """Fused MLP forward for one batch tile.

    refs = (x_ref, w0, b0, w1, b1, ..., wL, bL, out_ref)
    Hidden layers use ReLU; the final Linear has no activation.
    MXU operands are `mxu_dtype`; accumulation, bias-add and ReLU are float32.
    """
    x_ref = refs[0]
    out_ref = refs[-1]
    params = refs[1:-1]
    n_layers = len(params) // 2  # n_hidden + 1

    h = x_ref[...]
    if h.dtype != jnp.dtype(mxu_dtype):
        h = h.astype(mxu_dtype)

    for layer in range(n_layers):
        w = params[2 * layer][...]                 # (K, N) in mxu_dtype
        b = params[2 * layer + 1][...]             # (1, N) float32
        acc = jnp.dot(h, w, preferred_element_type=jnp.float32) + b
        if layer < n_hidden:                       # ReLU on hidden layers only
            acc = jnp.maximum(acc, 0.0)
            h = acc if jnp.dtype(mxu_dtype) == jnp.dtype(jnp.float32) \
                else acc.astype(mxu_dtype)
        else:
            h = acc                                # final layer stays f32

    out_ref[...] = h.astype(out_ref.dtype)


def prepare_params(weights, biases, mxu_dtype=jnp.bfloat16):
    """One-time padding/packing of parameters (hoisted out of the forward path).

    weights[i]: (in_features, out_features) — pre-transposed vs PyTorch (out,in).
    biases[i]:  (out_features,)

    Hidden widths are zero-padded to multiples of 128 (lane-dense intermediates,
    tiny & VMEM-resident). The layer-0 input dim and the last-layer output dim
    are kept at their true sizes so x / out stream unpadded through HBM.
    """
    assert len(weights) == len(biases)
    in_dim = weights[0].shape[0]
    out_dim = weights[-1].shape[1]
    dims = [in_dim] + [w.shape[1] for w in weights]
    pdims = [in_dim] + [_round_up(d, _LANE) for d in dims[1:-1]] + [out_dim]

    ops = []
    for li, (w, b) in enumerate(zip(weights, biases)):
        fi, fo = w.shape
        pi, po = pdims[li], pdims[li + 1]
        w_p = jnp.zeros((pi, po), mxu_dtype).at[:fi, :fo].set(w.astype(mxu_dtype))
        b_p = jnp.zeros((1, po), jnp.float32).at[:, :fo].set(
            b.astype(jnp.float32).reshape(1, -1))
        ops.append(w_p)
        ops.append(b_p)
    return tuple(ops)


def stitching_retargeting_forward(x, padded_params, *, batch_tile: int = 2048):
    """MLP forward with a single batch-tiled pallas_call.

    Args:
      x: (B, input_size) array (any float dtype; cast to the MXU dtype).
      padded_params: output of prepare_params() (w0, b0, ..., wL, bL).
      batch_tile: max rows per grid step (rounded to a multiple of 8).
    Returns:
      (B, output_size) float32.
    """
    n_layers = len(padded_params) // 2
    n_hidden = n_layers - 1
    mxu_dtype = padded_params[0].dtype            # weights carry the MXU dtype
    out_dim = padded_params[-2].shape[1]          # last weight: (K, out_dim)

    B, in_dim = x.shape
    assert padded_params[0].shape[0] == in_dim

    x_io_dtype = jnp.float32 if mxu_dtype == jnp.dtype(jnp.float32) else mxu_dtype

    # Batch tile: multiple of 8, at most batch_tile, and small enough that the
    # grid has >= 2 steps (keeps both v7x TensorCores busy, pipeline alive).
    tb = _round_up(max(1, -(-B // 2)), _SUBLANE)
    tb = max(_SUBLANE, min(tb, _round_up(batch_tile, _SUBLANE)))
    b_pad = _round_up(B, tb)
    grid = (b_pad // tb,)

    # Only batch-row padding (no lane padding of x); extra rows are zero and
    # their (nonzero after bias) outputs are sliced off below.
    x_io = x.astype(x_io_dtype)
    if b_pad > B:
        x_io = jnp.pad(x_io, ((0, b_pad - B), (0, 0)))

    # x / out tiled along the batch grid axis (last block dim == full array dim,
    # so no 128-multiple requirement); weights & biases have constant index_maps
    # and stay VMEM-resident across batch steps.
    in_specs = [pl.BlockSpec((tb, in_dim), lambda i: (i, 0))]
    for op in padded_params:
        in_specs.append(pl.BlockSpec(op.shape, lambda i: (0, 0)))
    out_spec = pl.BlockSpec((tb, out_dim), lambda i: (i, 0))

    # VMEM budget: double-buffered x/out blocks + resident params + headroom.
    x_blk = tb * in_dim * jnp.dtype(x_io_dtype).itemsize
    o_blk = tb * out_dim * 4
    p_bytes = sum(int(op.size) * op.dtype.itemsize for op in padded_params)
    vmem_limit = int(min(32 << 20,
                         max(8 << 20, 2 * x_blk + 2 * o_blk + 2 * p_bytes + (2 << 20))))

    kernel = functools.partial(_mlp_kernel, n_hidden, mxu_dtype)

    out = pl.pallas_call(
        kernel,
        out_shape=jax.ShapeDtypeStruct((b_pad, out_dim), jnp.float32),
        grid_spec=pltpu.PrefetchScalarGridSpec(
            num_scalar_prefetch=0,
            grid=grid,
            in_specs=in_specs,
            out_specs=out_spec,
        ),
        compiler_params=pltpu.CompilerParams(
            dimension_semantics=("parallel",),    # batch axis: megacore-friendly
            vmem_limit_bytes=vmem_limit),
    )(x_io, *padded_params)

    return out[:B] if b_pad > B else out


def init_params(key, input_size, hidden_sizes, output_size):
    """Deterministic init mimicking PyTorch nn.Linear default:
    weights & biases ~ U(-1/sqrt(fan_in), 1/sqrt(fan_in))."""
    sizes = [input_size] + list(hidden_sizes) + [output_size]
    weights, biases = [], []
    for i in range(len(sizes) - 1):
        fan_in, fan_out = sizes[i], sizes[i + 1]
        bound = 1.0 / math.sqrt(fan_in)
        key, kw, kb = jax.random.split(key, 3)
        # Stored as (in, out): equivalent to PyTorch's (out, in), pre-transposed.
        w = jax.random.uniform(kw, (fan_in, fan_out), jnp.float32, -bound, bound)
        b = jax.random.uniform(kb, (fan_out,), jnp.float32, -bound, bound)
        weights.append(w)
        biases.append(b)
    return weights, biases


def reference_forward(x, weights, biases):
    h = x
    n_layers = len(weights)
    for i, (w, b) in enumerate(zip(weights, biases)):
        h = h @ w + b
        if i < n_layers - 1:
            h = jnp.maximum(h, 0.0)
    return h


if __name__ == "__main__":
    # Small shapes consistent with the module: x of shape (B, input_size).
    # B=48 -> tb=24 -> grid=(2,), exercising multi-step batch tiling.
    B = 48
    input_size = 32
    hidden_sizes = [64, 64]
    output_size = 16

    key = jax.random.PRNGKey(0)
    key, kx = jax.random.split(key)
    x = jax.random.normal(kx, (B, input_size), jnp.float32)
    weights, biases = init_params(key, input_size, hidden_sizes, output_size)

    ref = reference_forward(x, weights, biases)

    # bf16 MXU operands / bf16 x I/O, f32 accumulate+bias+ReLU (default path).
    params_bf16 = prepare_params(weights, biases, mxu_dtype=jnp.bfloat16)
    fwd_bf16 = jax.jit(lambda xx, pp: stitching_retargeting_forward(xx, pp))
    out_bf16 = jax.block_until_ready(fwd_bf16(x, params_bf16))
    assert out_bf16.shape == (B, output_size)
    assert jnp.allclose(out_bf16, ref, atol=5e-2, rtol=5e-2), "bf16 mismatch vs reference"

    # f32 MXU path (bit-accurate vs the reference up to f32 rounding).
    params_f32 = prepare_params(weights, biases, mxu_dtype=jnp.float32)
    fwd_f32 = jax.jit(lambda xx, pp: stitching_retargeting_forward(xx, pp))
    out_f32 = jax.block_until_ready(fwd_f32(x, params_f32))
    assert out_f32.shape == (B, output_size)
    assert jnp.allclose(out_f32, ref, atol=1e-5, rtol=1e-5), "f32 mismatch vs reference"

    print("KERNEL_OK")
</pallas_src>

<mosaic_0001>
module attributes {stable_mosaic.version = 11 : i64} {
  func.func @_mlp_kernel(%arg0: i32, %arg1: memref<24x32xbf16, #tpu.memory_space<vmem>>, %arg2: memref<32x128xbf16, #tpu.memory_space<vmem>>, %arg3: memref<1x128xf32, #tpu.memory_space<vmem>>, %arg4: memref<128x128xbf16, #tpu.memory_space<vmem>>, %arg5: memref<1x128xf32, #tpu.memory_space<vmem>>, %arg6: memref<128x16xbf16, #tpu.memory_space<vmem>>, %arg7: memref<1x16xf32, #tpu.memory_space<vmem>>, %arg8: memref<24x16xf32, #tpu.memory_space<vmem>>) attributes {dimension_semantics = [#tpu.dimension_semantics<parallel>], iteration_bounds = array<i64: 2>, scalar_prefetch = 0 : i64, scratch_operands = 0 : i64, tpu.core_type = #tpu.core_type<tc>, window_params = [{transform_indices = @transform_0, window_bounds = array<i64: 24, 32>}, {pipeline_mode = #tpu.pipeline_mode<synchronous>, transform_indices = @transform_1, window_bounds = array<i64: 32, 128>}, {pipeline_mode = #tpu.pipeline_mode<synchronous>, transform_indices = @transform_2, window_bounds = array<i64: 1, 128>}, {pipeline_mode = #tpu.pipeline_mode<synchronous>, transform_indices = @transform_3, window_bounds = array<i64: 128, 128>}, {pipeline_mode = #tpu.pipeline_mode<synchronous>, transform_indices = @transform_4, window_bounds = array<i64: 1, 128>}, {pipeline_mode = #tpu.pipeline_mode<synchronous>, transform_indices = @transform_5, window_bounds = array<i64: 128, 16>}, {pipeline_mode = #tpu.pipeline_mode<synchronous>, transform_indices = @transform_6, window_bounds = array<i64: 1, 16>}, {transform_indices = @transform_7, window_bounds = array<i64: 24, 16>}]} {
    %c0 = arith.constant 0 : index
    %c0_0 = arith.constant 0 : index
    %0 = vector.load %arg1[%c0, %c0_0] : memref<24x32xbf16, #tpu.memory_space<vmem>>, vector<24x32xbf16>
    %c0_1 = arith.constant 0 : index
    %c0_2 = arith.constant 0 : index
    %1 = vector.load %arg2[%c0_1, %c0_2] : memref<32x128xbf16, #tpu.memory_space<vmem>>, vector<32x128xbf16>
    %c0_3 = arith.constant 0 : index
    %c0_4 = arith.constant 0 : index
    %2 = vector.load %arg3[%c0_3, %c0_4] : memref<1x128xf32, #tpu.memory_space<vmem>>, vector<1x128xf32>
    %cst = arith.constant dense<0.000000e+00> : vector<24x128xf32>
    %3 = tpu.matmul %0, %1, %cst {dimension_numbers = #tpu.dot_dimension_numbers<[1], [0], [0], [1], [0, 0, 1, 1], [], []>} : vector<24x32xbf16>, vector<32x128xbf16>, vector<24x128xf32> -> vector<24x128xf32>
    %4 = vector.broadcast %2 : vector<1x128xf32> to vector<24x128xf32>
    %5 = arith.addf %3, %4 : vector<24x128xf32>
    %cst_5 = arith.constant 0.000000e+00 : f32
    %6 = vector.broadcast %cst_5 : f32 to vector<24x128xf32>
    %7 = arith.maximumf %5, %6 : vector<24x128xf32>
    %8 = arith.truncf %7 : vector<24x128xf32> to vector<24x128xbf16>
    %c0_6 = arith.constant 0 : index
    %c0_7 = arith.constant 0 : index
    %9 = vector.load %arg4[%c0_6, %c0_7] : memref<128x128xbf16, #tpu.memory_space<vmem>>, vector<128x128xbf16>
    %c0_8 = arith.constant 0 : index
    %c0_9 = arith.constant 0 : index
    %10 = vector.load %arg5[%c0_8, %c0_9] : memref<1x128xf32, #tpu.memory_space<vmem>>, vector<1x128xf32>
    %cst_10 = arith.constant dense<0.000000e+00> : vector<24x128xf32>
    %11 = tpu.matmul %8, %9, %cst_10 {dimension_numbers = #tpu.dot_dimension_numbers<[1], [0], [0], [1], [0, 0, 1, 1], [], []>} : vector<24x128xbf16>, vector<128x128xbf16>, vector<24x128xf32> -> vector<24x128xf32>
    %12 = vector.broadcast %10 : vector<1x128xf32> to vector<24x128xf32>
    %13 = arith.addf %11, %12 : vector<24x128xf32>
    %cst_11 = arith.constant 0.000000e+00 : f32
    %14 = vector.broadcast %cst_11 : f32 to vector<24x128xf32>
    %15 = arith.maximumf %13, %14 : vector<24x128xf32>
    %16 = arith.truncf %15 : vector<24x128xf32> to vector<24x128xbf16>
    %c0_12 = arith.constant 0 : index
    %c0_13 = arith.constant 0 : index
    %17 = vector.load %arg6[%c0_12, %c0_13] : memref<128x16xbf16, #tpu.memory_space<vmem>>, vector<128x16xbf16>
    %c0_14 = arith.constant 0 : index
    %c0_15 = arith.constant 0 : index
    %18 = vector.load %arg7[%c0_14, %c0_15] : memref<1x16xf32, #tpu.memory_space<vmem>>, vector<1x16xf32>
    %cst_16 = arith.constant dense<0.000000e+00> : vector<24x16xf32>
    %19 = tpu.matmul %16, %17, %cst_16 {dimension_numbers = #tpu.dot_dimension_numbers<[1], [0], [0], [1], [0, 0, 1, 1], [], []>} : vector<24x128xbf16>, vector<128x16xbf16>, vector<24x16xf32> -> vector<24x16xf32>
    %20 = vector.broadcast %18 : vector<1x16xf32> to vector<24x16xf32>
    %21 = arith.addf %19, %20 : vector<24x16xf32>
    %c0_17 = arith.constant 0 : index
    %c0_18 = arith.constant 0 : index
    %22 = vector.load %arg8[%c0_17, %c0_18] : memref<24x16xf32, #tpu.memory_space<vmem>>, vector<24x16xf32>
    tpu.vector_store %arg8[%c0_17, %c0_18], %21 {strides = array<i32>} : memref<24x16xf32, #tpu.memory_space<vmem>>, vector<24x16xf32>,
    return
  }
  func.func @transform_0(%arg0: i32) -> (i32, i32) {
    %c0_i32 = arith.constant 0 : i32
    %c0_i32_0 = arith.constant 0 : i32
    return %arg0, %c0_i32 : i32, i32
  }
  func.func @transform_1(%arg0: i32) -> (i32, i32) {
    %c0_i32 = arith.constant 0 : i32
    %c0_i32_0 = arith.constant 0 : i32
    %c0_i32_1 = arith.constant 0 : i32
    return %c0_i32, %c0_i32_0 : i32, i32
  }
  func.func @transform_2(%arg0: i32) -> (i32, i32) {
    %c0_i32 = arith.constant 0 : i32
    %c0_i32_0 = arith.constant 0 : i32
    %c0_i32_1 = arith.constant 0 : i32
    return %c0_i32, %c0_i32_0 : i32, i32
  }
  func.func @transform_3(%arg0: i32) -> (i32, i32) {
    %c0_i32 = arith.constant 0 : i32
    %c0_i32_0 = arith.constant 0 : i32
    %c0_i32_1 = arith.constant 0 : i32
    return %c0_i32, %c0_i32_0 : i32, i32
  }
  func.func @transform_4(%arg0: i32) -> (i32, i32) {
    %c0_i32 = arith.constant 0 : i32
    %c0_i32_0 = arith.constant 0 : i32
    %c0_i32_1 = arith.constant 0 : i32
    return %c0_i32, %c0_i32_0 : i32, i32
  }
  func.func @transform_5(%arg0: i32) -> (i32, i32) {
    %c0_i32 = arith.constant 0 : i32
    %c0_i32_0 = arith.constant 0 : i32
    %c0_i32_1 = arith.constant 0 : i32
    return %c0_i32, %c0_i32_0 : i32, i32
  }
  func.func @transform_6(%arg0: i32) -> (i32, i32) {
    %c0_i32 = arith.constant 0 : i32
    %c0_i32_0 = arith.constant 0 : i32
    %c0_i32_1 = arith.constant 0 : i32
    return %c0_i32, %c0_i32_0 : i32, i32
  }
  func.func @transform_7(%arg0: i32) -> (i32, i32) {
    %c0_i32 = arith.constant 0 : i32
    %c0_i32_0 = arith.constant 0 : i32
    return %arg0, %c0_i32 : i32, i32
  }
}

</mosaic_0001>

<llo_original>
// kernel: _lambda_.1
$region0: #{_lambda_.1}
  #allocation0 [shape = 'u32[]', space=smem, size = 0x4, offset = 0x4, fixed_abs, tag = 'smem constant byte address 0x4 - core index']
  #allocation1 [shape = 'u32[144,128]{1,0:T(1,128)}', space=vmem, size = 0x12000, scoped, tag = 'internal scratch']
  %s0 = inlined_call_operand.vmem [shape: bf16[48,32], index: 0, kind: input, shape index: {}]
  %s1 = inlined_call_operand.vmem [shape: bf16[32,128], index: 1, kind: input, shape index: {}]
  %s2 = inlined_call_operand.vmem [shape: f32[1,128], index: 2, kind: input, shape index: {}]
  %s3 = inlined_call_operand.vmem [shape: bf16[128,128], index: 3, kind: input, shape index: {}]
  %s4 = inlined_call_operand.vmem [shape: f32[1,128], index: 4, kind: input, shape index: {}]
  %s5 = inlined_call_operand.vmem [shape: bf16[128,16], index: 5, kind: input, shape index: {}]
  %s6 = inlined_call_operand.vmem [shape: f32[1,16], index: 6, kind: input, shape index: {}]
  %s7 = inlined_call_operand.vmem [shape: f32[48,16], index: 7, kind: output, shape index: {}]
  %s8 = sld [smem:[#allocation0]]
  $region61: #{_lambda_.1} parent=0
    _
  %s10 = ssub.s32 1, %s8
  %s11 = scalar_select 0, %s10, %s8
  loop: start=0, step=1, limit=4
  $region2: #{_lambda_.1} parent=0 // loop_pre_header
    _
  $region3: #{_lambda_.1} parent=0 // loop_header
    %s13 = sphi 0, %s17
    %p14 = scmp.ge.s32.totalorder %s13, 4
    %s23 = sphi 0, %s25
    %s26 = sphi 0, %s23
    %s27 = sphi 0, %s26
    %s43 = sphi 0, %s27
    %s47 = sphi 0, %s47
    %s49 = sphi 0, %s47
    %s50 = sphi 0, %s49
    %s64 = sphi 0, %s50
    %s68 = sphi 0, %s68
    %s70 = sphi 0, %s68
    %s71 = sphi 0, %s70
    %s85 = sphi 0, %s71
    %s89 = sphi 0, %s89
    %s91 = sphi 0, %s89
    %s92 = sphi 0, %s91
    %s106 = sphi 0, %s92
    %s110 = sphi 0, %s110
    %s112 = sphi 0, %s110
    %s113 = sphi 0, %s112
    %s127 = sphi 0, %s113
    %s131 = sphi 0, %s131
    %s133 = sphi 0, %s131
    %s134 = sphi 0, %s133
    %s148 = sphi 0, %s134
    %s152 = sphi 0, %s152
    %s154 = sphi 0, %s152
    %s155 = sphi 0, %s154
    %s169 = sphi 0, %s155
    %s175 = sphi 0, %s177
    %s178 = sphi 0, %s175
    %s179 = sphi 0, %s178
    %s195 = sphi 0, %s179
  $region4: #{_lambda_.1} parent=0 // loop_header_branch
    %16 = sbr.rel (%p14) target = $region8
  $region5: #{_lambda_.1} parent=0 // loop_body
    %s18 = ssub.s32 %s13, 1
    %s19 = ssub.s32 %s13, 2
    %s20 = sadd.s32 %s13, 1
    %s21 = ssub.s32 %s13, %s20
    %p22 = scmp.eq.s32.totalorder %s21, 0
    %s24 = sadd.s32 %s23, 1
    %s25 = scalar_select %p22, %s23, %s24
    %p28 = pneg %p22
    %p29 = scmp.eq.s32.totalorder %s13, 1
    %p30 = por %p28, %p29
    %p31 = scmp.ne.s32.totalorder %s23, %s26
    %p32 = scmp.eq.s32.totalorder %s13, 0
    %p33 = por %p31, %p32
    %p34 = scmp.ne.s32.totalorder %s23, %s26
    %p35 = scmp.eq.s32.totalorder %s18, 1
    %p36 = por %p34, %p35
    %p37 = scmp.ne.s32.totalorder %s26, %s27
    %p38 = scmp.eq.s32.totalorder %s18, 0
    %p39 = por %p37, %p38
    %p40 = scmp.ne.s32.totalorder %s26, %s27
    %p41 = scmp.eq.s32.totalorder %s19, 1
    %p42 = por %p40, %p41
    %p44 = scmp.ne.s32.totalorder %s27, %s43
    %p45 = scmp.eq.s32.totalorder %s19, 0
    %p46 = por %p44, %p45
    %s48 = sadd.s32 %s47, 1
    %p51 = scmp.eq.s32.totalorder %s13, 1
    %p52 = scmp.ne.s32.totalorder %s47, %s49
    %p53 = scmp.eq.s32.totalorder %s13, 0
    %p54 = por %p52, %p53
    %p55 = scmp.ne.s32.totalorder %s47, %s49
    %p56 = scmp.eq.s32.totalorder %s18, 1
    %p57 = por %p55, %p56
    %p58 = scmp.ne.s32.totalorder %s49, %s50
    %p59 = scmp.eq.s32.totalorder %s18, 0
    %p60 = por %p58, %p59
    %p61 = scmp.ne.s32.totalorder %s49, %s50
    %p62 = scmp.eq.s32.totalorder %s19, 1
    %p63 = por %p61, %p62
    %p65 = scmp.ne.s32.totalorder %s50, %s64
    %p66 = scmp.eq.s32.totalorder %s19, 0
    %p67 = por %p65, %p66
    %s69 = sadd.s32 %s68, 1
    %p72 = scmp.eq.s32.totalorder %s13, 1
    %p73 = scmp.ne.s32.totalorder %s68, %s70
    %p74 = scmp.eq.s32.totalorder %s13, 0
    %p75 = por %p73, %p74
    %p76 = scmp.ne.s32.totalorder %s68, %s70
    %p77 = scmp.eq.s32.totalorder %s18, 1
    %p78 = por %p76, %p77
    %p79 = scmp.ne.s32.totalorder %s70, %s71
    %p80 = scmp.eq.s32.totalorder %s18, 0
    %p81 = por %p79, %p80
    %p82 = scmp.ne.s32.totalorder %s70, %s71
    %p83 = scmp.eq.s32.totalorder %s19, 1
    %p84 = por %p82, %p83
    %p86 = scmp.ne.s32.totalorder %s71, %s85
    %p87 = scmp.eq.s32.totalorder %s19, 0
    %p88 = por %p86, %p87
    %s90 = sadd.s32 %s89, 1
    %p93 = scmp.eq.s32.totalorder %s13, 1
    %p94 = scmp.ne.s32.totalorder %s89, %s91
    %p95 = scmp.eq.s32.totalorder %s13, 0
    %p96 = por %p94, %p95
    %p97 = scmp.ne.s32.totalorder %s89, %s91
    %p98 = scmp.eq.s32.totalorder %s18, 1
    %p99 = por %p97, %p98
    %p100 = scmp.ne.s32.totalorder %s91, %s92
    %p101 = scmp.eq.s32.totalorder %s18, 0
    %p102 = por %p100, %p101
    %p103 = scmp.ne.s32.totalorder %s91, %s92
    %p104 = scmp.eq.s32.totalorder %s19, 1
    %p105 = por %p103, %p104
    %p107 = scmp.ne.s32.totalorder %s92, %s106
    %p108 = scmp.eq.s32.totalorder %s19, 0
    %p109 = por %p107, %p108
    %s111 = sadd.s32 %s110, 1
    %p114 = scmp.eq.s32.totalorder %s13, 1
    %p115 = scmp.ne.s32.totalorder %s110, %s112
    %p116 = scmp.eq.s32.totalorder %s13, 0
    %p117 = por %p115, %p116
    %p118 = scmp.ne.s32.totalorder %s110, %s112
    %p119 = scmp.eq.s32.totalorder %s18, 1
    %p120 = por %p118, %p119
    %p121 = scmp.ne.s32.totalorder %s112, %s113
    %p122 = scmp.eq.s32.totalorder %s18, 0
    %p123 = por %p121, %p122
    %p124 = scmp.ne.s32.totalorder %s112, %s113
    %p125 = scmp.eq.s32.totalorder %s19, 1
    %p126 = por %p124, %p125
    %p128 = scmp.ne.s32.totalorder %s113, %s127
    %p129 = scmp.eq.s32.totalorder %s19, 0
    %p130 = por %p128, %p129
    %s132 = sadd.s32 %s131, 1
    %p135 = scmp.eq.s32.totalorder %s13, 1
    %p136 = scmp.ne.s32.totalorder %s131, %s133
    %p137 = scmp.eq.s32.totalorder %s13, 0
    %p138 = por %p136, %p137
    %p139 = scmp.ne.s32.totalorder %s131, %s133
    %p140 = scmp.eq.s32.totalorder %s18, 1
    %p141 = por %p139, %p140
    %p142 = scmp.ne.s32.totalorder %s133, %s134
    %p143 = scmp.eq.s32.totalorder %s18, 0
    %p144 = por %p142, %p143
    %p145 = scmp.ne.s32.totalorder %s133, %s134
    %p146 = scmp.eq.s32.totalorder %s19, 1
    %p147 = por %p145, %p146
    %p149 = scmp.ne.s32.totalorder %s134, %s148
    %p150 = scmp.eq.s32.totalorder %s19, 0
    %p151 = por %p149, %p150
    %s153 = sadd.s32 %s152, 1
    %p156 = scmp.eq.s32.totalorder %s13, 1
    %p157 = scmp.ne.s32.totalorder %s152, %s154
    %p158 = scmp.eq.s32.totalorder %s13, 0
    %p159 = por %p157, %p158
    %p160 = scmp.ne.s32.totalorder %s152, %s154
    %p161 = scmp.eq.s32.totalorder %s18, 1
    %p162 = por %p160, %p161
    %p163 = scmp.ne.s32.totalorder %s154, %s155
    %p164 = scmp.eq.s32.totalorder %s18, 0
    %p165 = por %p163, %p164
    %p166 = scmp.ne.s32.totalorder %s154, %s155
    %p167 = scmp.eq.s32.totalorder %s19, 1
    %p168 = por %p166, %p167
    %p170 = scmp.ne.s32.totalorder %s155, %s169
    %p171 = scmp.eq.s32.totalorder %s19, 0
    %p172 = por %p170, %p171
    %s173 = ssub.s32 %s13, %s20
    %p174 = scmp.eq.s32.totalorder %s173, 0
    %s176 = sadd.s32 %s175, 1
    %s177 = scalar_select %p174, %s175, %s176
    %p180 = pneg %p174
    %p181 = scmp.eq.s32.totalorder %s13, 1
    %p182 = por %p180, %p181
    %p183 = scmp.ne.s32.totalorder %s175, %s178
    %p184 = scmp.eq.s32.totalorder %s13, 0
    %p185 = por %p183, %p184
    %p186 = scmp.ne.s32.totalorder %s175, %s178
    %p187 = scmp.eq.s32.totalorder %s18, 1
    %p188 = por %p186, %p187
    %p189 = scmp.ne.s32.totalorder %s178, %s179
    %p190 = scmp.eq.s32.totalorder %s18, 0
    %p191 = por %p189, %p190
    %p192 = scmp.ne.s32.totalorder %s178, %s179
    %p193 = scmp.eq.s32.totalorder %s19, 1
    %p194 = por %p192, %p193
    %p196 = scmp.ne.s32.totalorder %s179, %s195
    %p197 = scmp.eq.s32.totalorder %s19, 0
    %p198 = por %p196, %p197
    %p199 = scmp.le.s32.totalorder 1, %s13
    %p200 = scmp.lt.s32.totalorder %s13, 3
    %p201 = pnand %p199, %p200
    %p202 = pneg %p201
    // Predicated region
    $region9: #{_lambda_.1} parent=5 // pred_check
      _
    $region10: #{_lambda_.1} parent=5 // pred_check_branch
      %204 = sbr.rel (%p201) target = $region12
    $region11: #{_lambda_.1} parent=5 // pred_region
      %s205 = ssub.s32 %s13, 1
      // Predicated region
      $region13: #{_lambda_.1} parent=11 // pred_check
        %p206 = pneg %p60
      $region14: #{_lambda_.1} parent=11 // pred_check_branch
        %208 = sbr.rel (%p206) target = $region16
      $region15: #{_lambda_.1} parent=11 // pred_region
        _
      $region16: #{_lambda_.1} parent=11 // pred_fallthru
        _
      // Predicated region
      $region17: #{_lambda_.1} parent=11 // pred_check
        %p209 = pneg %p81
      $region18: #{_lambda_.1} parent=11 // pred_check_branch
        %211 = sbr.rel (%p209) target = $region20
      $region19: #{_lambda_.1} parent=11 // pred_region
        _
      $region20: #{_lambda_.1} parent=11 // pred_fallthru
        _
      // Predicated region
      $region21: #{_lambda_.1} parent=11 // pred_check
        %p212 = pneg %p102
      $region22: #{_lambda_.1} parent=11 // pred_check_branch
        %214 = sbr.rel (%p212) target = $region24
      $region23: #{_lambda_.1} parent=11 // pred_region
        _
      $region24: #{_lambda_.1} parent=11 // pred_fallthru
        _
      // Predicated region
      $region25: #{_lambda_.1} parent=11 // pred_check
        %p215 = pneg %p123
      $region26: #{_lambda_.1} parent=11 // pred_check_branch
        %217 = sbr.rel (%p215) target = $region28
      $region27: #{_lambda_.1} parent=11 // pred_region
        _
      $region28: #{_lambda_.1} parent=11 // pred_fallthru
        _
      // Predicated region
      $region29: #{_lambda_.1} parent=11 // pred_check
        %p218 = pneg %p144
      $region30: #{_lambda_.1} parent=11 // pred_check_branch
        %220 = sbr.rel (%p218) target = $region32
      $region31: #{_lambda_.1} parent=11 // pred_region
        _
      $region32: #{_lambda_.1} parent=11 // pred_fallthru
        _
      // Predicated region
      $region33: #{_lambda_.1} parent=11 // pred_check
        %p221 = pneg %p165
      $region34: #{_lambda_.1} parent=11 // pred_check_branch
        %223 = sbr.rel (%p221) target = $region36
      $region35: #{_lambda_.1} parent=11 // pred_region
        _
      $region36: #{_lambda_.1} parent=11 // pred_fallthru
        _
    $region12: #{_lambda_.1} parent=5 // pred_fallthru
      _
    %p224 = scmp.lt.s32.totalorder %s13, 2
    // Predicated region
    $region37: #{_lambda_.1} parent=5 // pred_check
      %p225 = pneg %p224
    $region38: #{_lambda_.1} parent=5 // pred_check_branch
      %227 = sbr.rel (%p225) target = $region40
    $region39: #{_lambda_.1} parent=5 // pred_region
      // Predicated region
      $region41: #{_lambda_.1} parent=39 // pred_check
        %p228 = pneg %p33
      $region42: #{_lambda_.1} parent=39 // pred_check_branch
        %230 = sbr.rel (%p228) target = $region44
      $region43: #{_lambda_.1} parent=39 // pred_region
        %s231 = smul.u32 3, %s13
        %p232 = scmp.lt.s32.totalorder %s231, 5
        %s233 = scalar_select %p232, %s231, 5
        %s234 = smul.addr %s233, 4
        %s235 = scalar_lea.vmem %s0, %s234
        %s236 = smul.u32 3, %s13
      $region44: #{_lambda_.1} parent=39 // pred_fallthru
        _
    $region40: #{_lambda_.1} parent=5 // pred_fallthru
      _
    %p237 = scmp.le.s32.totalorder 1, %s13
    %p238 = scmp.lt.s32.totalorder %s13, 3
    %p239 = pnand %p237, %p238
    %p240 = pneg %p239
    // Predicated region
    $region45: #{_lambda_.1} parent=5 // pred_check
      _
    $region46: #{_lambda_.1} parent=5 // pred_check_branch
      %242 = sbr.rel (%p239) target = $region48
    $region47: #{_lambda_.1} parent=5 // pred_region
      %s243 = ssub.s32 %s13, 1
      %s244 = smul.u32 3, %s18
      %p245 = scmp.lt.s32.totalorder %s244, 5
      %s246 = scalar_select %p245, %s244, 5
      %s247 = smul.addr %s246, 4
      %s248 = scalar_lea.vmem %s0, %s247
      %p249 = pneg %p39
      %p250 = pneg %p36
      %p251 = pneg %p60
      %p252 = pneg %p57
      %p253 = pneg %p81
      %p254 = pneg %p78
      %p255 = pneg %p102
      %p256 = pneg %p99
      %p257 = pneg %p123
      %p258 = pneg %p120
      %p259 = pneg %p144
      %p260 = pneg %p141
      %p261 = pneg %p165
      %p262 = pneg %p162
      %p263 = pneg %p191
      %p264 = pneg %p188
      %s265 = smul.u32 3, %s18
      %p266 = scmp.lt.s32.totalorder %s265, 5
      %s267 = scalar_select %p266, %s265, 5
      %s268 = smul.addr %s267, 8
      %s269 = scalar_lea.vmem %s7, %s268
      %s270 = smul.u32 3, %s18
      %p271 = scmp.lt.s32.totalorder %s270, 5
      %s272 = scalar_select %p271, %s270, 5
      %s273 = smul.addr %s272, 4
      %s274 = scalar_lea.vmem %s0, %s273
      %s275 = smul.u32 3, %s18
      %s276 = smul.u32 3, %s18
      %p277 = scmp.lt.s32.totalorder %s276, 5
      %s278 = scalar_select %p277, %s276, 5
      %s279 = smul.addr %s278, 8
      %s280 = scalar_lea.vmem %s7, %s279
      %s281 = smul.u32 3, %s18
      %v283 = vld [vmem:[%s274] sm:$0xf]
      %v284 = vld [vmem:[%s274 + $0x4] sm:$0xf]
      %v285 = vld [vmem:[%s274 + $0x8] sm:$0xf]
      %v286 = vld [vmem:[%s1] sm:$0xf]
      %v287 = vld [vmem:[%s1 + $0x4] sm:$0xf]
      %v288 = vld [vmem:[%s1 + $0x8] sm:$0xf]
      %v289 = vld [vmem:[%s1 + $0xc] sm:$0xf]
      %v290 = vld [vmem:[%s2] sm:$0x1]
      %v292 = vlaneseq
      %v293 = vshrl.u32 %v292, 7
      %v294 = vsub.s32 0, %v293
      %v295 = vrot.slane %v290, %v294
      %v300 = vunpack.c.l.b16 %v283
      %v301 = vunpack.c.l.b16 %v284
      %v302 = vunpack.c.l.b16 %v285
      %v303 = vpack.c.b16 %v301, %v300
      %v304 = vpack.c.b16 %v302, %v302
      %v309 = vunpack.c.l.b16 %v286
      %v310 = vunpack.c.l.b16 %v287
      %v311 = vunpack.c.l.b16 %v288
      %v312 = vunpack.c.l.b16 %v289
      %v313 = vpack.c.b16 %v310, %v309
      %v314 = vpack.c.b16 %v312, %v311
      %vm317 = vcmask 261120
      %v319 = vsel %vm317, %v303, 0
      %v322 = vsel %vm317, %v304, 0
      %324 = vmatprep.subr.bf16.mxu0 0
      %325 = vmatpush1.bf16.msra.mxu0 %v313
      %326 = vmatprep.subr.bf16.mxu0 0
      %327 = vmatpush1.bf16.msra.mxu0 %v314
      %328 = vmatprep.subr.bf16.mxu0 0
      %329 = vmatpush1.bf16.msra.mxu0 0
      %330 = vmatprep.subr.bf16.mxu0 0
      %331 = vmatpush1.bf16.msra.mxu0 0
      %332 = vmatprep.subr.bf16.mxu0 0
      %333 = vmatpush1.bf16.msra.mxu0 0
      %334 = vmatprep.subr.bf16.mxu0 0
      %335 = vmatpush1.bf16.msra.mxu0 0
      %336 = vmatprep.subr.bf16.mxu0 0
      %337 = vmatpush1.bf16.msra.mxu0 0
      %338 = vmatprep.subr.bf16.mxu0 0
      %339 = vmatpush1.bf16.msra.mxu0 0
      %340 = vmatprep.subr.bf16.mxu0 0
      %341 = vmatpush1.bf16.msra.mxu0 0
      %342 = vmatprep.subr.bf16.mxu0 0
      %343 = vmatpush1.bf16.msra.mxu0 0
      %344 = vmatprep.subr.bf16.mxu0 0
      %345 = vmatpush1.bf16.msra.mxu0 0
      %346 = vmatprep.subr.bf16.mxu0 0
      %347 = vmatpush1.bf16.msra.mxu0 0
      %348 = vmatprep.subr.bf16.mxu0 0
      %349 = vmatpush1.bf16.msra.mxu0 0
      %350 = vmatprep.subr.bf16.mxu0 0
      %351 = vmatpush1.bf16.msra.mxu0 0
      %352 = vmatprep.subr.bf16.mxu0 0
      %353 = vmatpush1.bf16.msra.mxu0 0
      %354 = vmatprep.subr.bf16.mxu0 0
      %355 = vmatpush1.bf16.msra.mxu0 0
      %356 = vmatprep.mubr.bf16.mxu0 0
      %357 = vmatmul.mubr.bf16.gmra.mrb[0].mxu0 %v319
      %v358 = vpop.f32.mrb[0].mxu0
      %v359 = vadd.f32 %v295, %v358
      %v360 = vpop.f32.mrb[0].mxu0
      %v361 = vpop.f32.mrb[0].mxu0
      %v362 = vadd.f32 %v295, %v361
      %v363 = vpop.f32.mrb[0].mxu0
      %364 = vmatprep.mubr.bf16.mxu0 0
      %365 = vmatmul.mubr.bf16.gmra.mrb[0].mxu0 %v322
      %v366 = vpop.f32.mrb[0].mxu0
      %v367 = vadd.f32 %v295, %v366
      %v368 = vpop.f32.mrb[0].mxu0
      %v369 = vpop.f32.mrb[0].mxu0
      %v370 = vpop.f32.mrb[0].mxu0
      %371 = vdwg.mxu0
      %v372 = vmax.f32 %v359, 0.0
      %v373 = vmax.f32 %v362, 0.0
      %v374 = vmax.f32 %v367, 0.0
      %v375 = vpack.c.bf16 %v373, %v372
      %v376 = vpack.c.bf16 %v374, %v374
      %v377 = vld [vmem:[%s3] sm:$0xf]
      %v378 = vld [vmem:[%s3 + $0x4] sm:$0xf]
      %v379 = vld [vmem:[%s3 + $0x8] sm:$0xf]
      %v380 = vld [vmem:[%s3 + $0xc] sm:$0xf]
      %v381 = vld [vmem:[%s3 + $0x10] sm:$0xf]
      %v382 = vld [vmem:[%s3 + $0x14] sm:$0xf]
      %v383 = vld [vmem:[%s3 + $0x18] sm:$0xf]
      %v384 = vld [vmem:[%s3 + $0x1c] sm:$0xf]
      %v385 = vld [vmem:[%s3 + $0x20] sm:$0xf]
      %v386 = vld [vmem:[%s3 + $0x24] sm:$0xf]
      %v387 = vld [vmem:[%s3 + $0x28] sm:$0xf]
      %v388 = vld [vmem:[%s3 + $0x2c] sm:$0xf]
      %v389 = vld [vmem:[%s3 + $0x30] sm:$0xf]
      %v390 = vld [vmem:[%s3 + $0x34] sm:$0xf]
      %v391 = vld [vmem:[%s3 + $0x38] sm:$0xf]
      %v392 = vld [vmem:[%s3 + $0x3c] sm:$0xf]
      %v393 = vld [vmem:[%s4] sm:$0x1]
      %v395 = vlaneseq
      %v396 = vshrl.u32 %v395, 7
      %v397 = vsub.s32 0, %v396
      %v398 = vrot.slane %v393, %v397
      %v416 = vunpack.c.l.b16 %v377
      %v417 = vunpack.c.l.b16 %v378
      %v418 = vunpack.c.l.b16 %v379
      %v419 = vunpack.c.l.b16 %v380
      %v420 = vunpack.c.l.b16 %v381
      %v421 = vunpack.c.l.b16 %v382
      %v422 = vunpack.c.l.b16 %v383
      %v423 = vunpack.c.l.b16 %v384
      %v424 = vunpack.c.l.b16 %v385
      %v425 = vunpack.c.l.b16 %v386
      %v426 = vunpack.c.l.b16 %v387
      %v427 = vunpack.c.l.b16 %v388
      %v428 = vunpack.c.l.b16 %v389
      %v429 = vunpack.c.l.b16 %v390
      %v430 = vunpack.c.l.b16 %v391
      %v431 = vunpack.c.l.b16 %v392
      %v432 = vpack.c.b16 %v417, %v416
      %v433 = vpack.c.b16 %v419, %v418
      %v434 = vpack.c.b16 %v421, %v420
      %v435 = vpack.c.b16 %v423, %v422
      %v436 = vpack.c.b16 %v425, %v424
      %v437 = vpack.c.b16 %v427, %v426
      %v438 = vpack.c.b16 %v429, %v428
      %v439 = vpack.c.b16 %v431, %v430
      %448 = vmatprep.subr.bf16.mxu0 0
      %449 = vmatpush1.bf16.msra.mxu0 %v432
      %450 = vmatprep.subr.bf16.mxu0 0
      %451 = vmatpush1.bf16.msra.mxu0 %v433
      %452 = vmatprep.subr.bf16.mxu0 0
      %453 = vmatpush1.bf16.msra.mxu0 %v434
      %454 = vmatprep.subr.bf16.mxu0 0
      %455 = vmatpush1.bf16.msra.mxu0 %v435
      %456 = vmatprep.subr.bf16.mxu0 0
      %457 = vmatpush1.bf16.msra.mxu0 %v436
      %458 = vmatprep.subr.bf16.mxu0 0
      %459 = vmatpush1.bf16.msra.mxu0 %v437
      %460 = vmatprep.subr.bf16.mxu0 0
      %461 = vmatpush1.bf16.msra.mxu0 %v438
      %462 = vmatprep.subr.bf16.mxu0 0
      %463 = vmatpush1.bf16.msra.mxu0 %v439
      %464 = vmatprep.subr.bf16.mxu0 0
      %465 = vmatpush1.bf16.msra.mxu0 0
      %466 = vmatprep.subr.bf16.mxu0 0
      %467 = vmatpush1.bf16.msra.mxu0 0
      %468 = vmatprep.subr.bf16.mxu0 0
      %469 = vmatpush1.bf16.msra.mxu0 0
      %470 = vmatprep.subr.bf16.mxu0 0
      %471 = vmatpush1.bf16.msra.mxu0 0
      %472 = vmatprep.subr.bf16.mxu0 0
      %473 = vmatpush1.bf16.msra.mxu0 0
      %474 = vmatprep.subr.bf16.mxu0 0
      %475 = vmatpush1.bf16.msra.mxu0 0
      %476 = vmatprep.subr.bf16.mxu0 0
      %477 = vmatpush1.bf16.msra.mxu0 0
      %478 = vmatprep.subr.bf16.mxu0 0
      %479 = vmatpush1.bf16.msra.mxu0 0
      %480 = vmatprep.mubr.bf16.mxu0 0
      %481 = vmatmul.mubr.bf16.gmra.mrb[0].mxu0 %v375
      %v482 = vpop.f32.mrb[0].mxu0
      %v483 = vadd.f32 %v398, %v482
      %v484 = vpop.f32.mrb[0].mxu0
      %v485 = vpop.f32.mrb[0].mxu0
      %v486 = vadd.f32 %v398, %v485
      %v487 = vpop.f32.mrb[0].mxu0
      %488 = vmatprep.mubr.bf16.mxu0 0
      %489 = vmatmul.mubr.bf16.gmra.mrb[0].mxu0 %v376
      %v490 = vpop.f32.mrb[0].mxu0
      %v491 = vadd.f32 %v398, %v490
      %v492 = vpop.f32.mrb[0].mxu0
      %v493 = vpop.f32.mrb[0].mxu0
      %v494 = vpop.f32.mrb[0].mxu0
      %495 = vdwg.mxu0
      %v496 = vmax.f32 %v483, 0.0
      %v497 = vmax.f32 %v486, 0.0
      %v498 = vmax.f32 %v491, 0.0
      %v499 = vpack.c.bf16 %v497, %v496
      %v500 = vpack.c.bf16 %v498, %v498
      %v501 = vld [vmem:[%s5] sm:$0xf]
      %v502 = vld [vmem:[%s5 + $0x4] sm:$0xf]
      %v503 = vld [vmem:[%s5 + $0x8] sm:$0xf]
      %v504 = vld [vmem:[%s5 + $0xc] sm:$0xf]
      %v505 = vld [vmem:[%s5 + $0x10] sm:$0xf]
      %v506 = vld [vmem:[%s5 + $0x14] sm:$0xf]
      %v507 = vld [vmem:[%s5 + $0x18] sm:$0xf]
      %v508 = vld [vmem:[%s5 + $0x1c] sm:$0xf]
      %v509 = vld [vmem:[%s5 + $0x20] sm:$0xf]
      %v510 = vld [vmem:[%s5 + $0x24] sm:$0xf]
      %v511 = vld [vmem:[%s5 + $0x28] sm:$0xf]
      %v512 = vld [vmem:[%s5 + $0x2c] sm:$0xf]
      %v513 = vld [vmem:[%s5 + $0x30] sm:$0xf]
      %v514 = vld [vmem:[%s5 + $0x34] sm:$0xf]
      %v515 = vld [vmem:[%s5 + $0x38] sm:$0xf]
      %v516 = vld [vmem:[%s5 + $0x3c] sm:$0xf]
      %v517 = vld [vmem:[%s6] sm:$0x1]
      %v519 = vlaneseq
      %v520 = vshrl.u32 %v519, 7
      %v521 = vsub.s32 0, %v520
      %v522 = vrot.slane %v517, %v521
      %v540 = vunpack.c.l.b16 %v501
      %v541 = vunpack.c.l.b16 %v502
      %v542 = vunpack.c.l.b16 %v503
      %v543 = vunpack.c.l.b16 %v504
      %v544 = vunpack.c.l.b16 %v505
      %v545 = vunpack.c.l.b16 %v506
      %v546 = vunpack.c.l.b16 %v507
      %v547 = vunpack.c.l.b16 %v508
      %v548 = vunpack.c.l.b16 %v509
      %v549 = vunpack.c.l.b16 %v510
      %v550 = vunpack.c.l.b16 %v511
      %v551 = vunpack.c.l.b16 %v512
      %v552 = vunpack.c.l.b16 %v513
      %v553 = vunpack.c.l.b16 %v514
      %v554 = vunpack.c.l.b16 %v515
      %v555 = vunpack.c.l.b16 %v516
      %v556 = vpack.c.b16 %v541, %v540
      %v557 = vpack.c.b16 %v543, %v542
      %v558 = vpack.c.b16 %v545, %v544
      %v559 = vpack.c.b16 %v547, %v546
      %v560 = vpack.c.b16 %v549, %v548
      %v561 = vpack.c.b16 %v551, %v550
      %v562 = vpack.c.b16 %v553, %v552
      %v563 = vpack.c.b16 %v555, %v554
      %572 = vmatprep.subr.bf16.mxu0 0
      %573 = vmatpush1.bf16.msra.mxu0 %v556
      %574 = vmatprep.subr.bf16.mxu0 0
      %575 = vmatpush1.bf16.msra.mxu0 %v557
      %576 = vmatprep.subr.bf16.mxu0 0
      %577 = vmatpush1.bf16.msra.mxu0 %v558
      %578 = vmatprep.subr.bf16.mxu0 0
      %579 = vmatpush1.bf16.msra.mxu0 %v559
      %580 = vmatprep.subr.bf16.mxu0 0
      %581 = vmatpush1.bf16.msra.mxu0 %v560
      %582 = vmatprep.subr.bf16.mxu0 0
      %583 = vmatpush1.bf16.msra.mxu0 %v561
      %584 = vmatprep.subr.bf16.mxu0 0
      %585 = vmatpush1.bf16.msra.mxu0 %v562
      %586 = vmatprep.subr.bf16.mxu0 0
      %587 = vmatpush1.bf16.msra.mxu0 %v563
      %588 = vmatprep.subr.bf16.mxu0 0
      %589 = vmatpush1.bf16.msra.mxu0 0
      %590 = vmatprep.subr.bf16.mxu0 0
      %591 = vmatpush1.bf16.msra.mxu0 0
      %592 = vmatprep.subr.bf16.mxu0 0
      %593 = vmatpush1.bf16.msra.mxu0 0
      %594 = vmatprep.subr.bf16.mxu0 0
      %595 = vmatpush1.bf16.msra.mxu0 0
      %596 = vmatprep.subr.bf16.mxu0 0
      %597 = vmatpush1.bf16.msra.mxu0 0
      %598 = vmatprep.subr.bf16.mxu0 0
      %599 = vmatpush1.bf16.msra.mxu0 0
      %600 = vmatprep.subr.bf16.mxu0 0
      %601 = vmatpush1.bf16.msra.mxu0 0
      %602 = vmatprep.subr.bf16.mxu0 0
      %603 = vmatpush1.bf16.msra.mxu0 0
      %604 = vmatprep.mubr.bf16.mxu0 0
      %605 = vmatmul.mubr.bf16.gmra.mrb[0].mxu0 %v499
      %v606 = vpop.f32.mrb[0].mxu0
      %v607 = vadd.f32 %v522, %v606
      %v608 = vpop.f32.mrb[0].mxu0
      %v609 = vpop.f32.mrb[0].mxu0
      %v610 = vadd.f32 %v522, %v609
      %v611 = vpop.f32.mrb[0].mxu0
      %612 = vmatprep.mubr.bf16.mxu0 0
      %613 = vmatmul.mubr.bf16.gmra.mrb[0].mxu0 %v500
      %v614 = vpop.f32.mrb[0].mxu0
      %v615 = vadd.f32 %v522, %v614
      %v616 = vpop.f32.mrb[0].mxu0
      %v617 = vpop.f32.mrb[0].mxu0
      %v618 = vpop.f32.mrb[0].mxu0
      %619 = vdwg.mxu0
      %vm620 = vcmask 130048
      %621 = vst.msk [vmem:[%s280] sm:$0xff] %vm620, %v607
      %622 = vst.msk [vmem:[%s280 + $0x8] sm:$0xff] %vm620, %v610
      %623 = vst.msk [vmem:[%s280 + $0x10] sm:$0xff] %vm620, %v615
      %s624 = smul.u32 3, %s18
      %p625 = scmp.lt.s32.totalorder %s624, 5
      %s626 = scalar_select %p625, %s624, 5
      %s627 = smul.addr %s626, 8
      %s628 = scalar_lea.vmem %s7, %s627
      // Predicated region
      $region49: #{_lambda_.1} parent=47 // pred_check
        %p629 = pneg %p188
      $region50: #{_lambda_.1} parent=47 // pred_check_branch
        %631 = sbr.rel (%p629) target = $region52
      $region51: #{_lambda_.1} parent=47 // pred_region
        %s632 = smul.u32 3, %s18
      $region52: #{_lambda_.1} parent=47 // pred_fallthru
        _
    $region48: #{_lambda_.1} parent=5 // pred_fallthru
      _
    %p633 = scmp.le.s32.totalorder 2, %s13
    // Predicated region
    $region53: #{_lambda_.1} parent=5 // pred_check
      %p634 = pneg %p633
    $region54: #{_lambda_.1} parent=5 // pred_check_branch
      %636 = sbr.rel (%p634) target = $region56
    $region55: #{_lambda_.1} parent=5 // pred_region
      %s637 = ssub.s32 %s13, 2
      // Predicated region
      $region57: #{_lambda_.1} parent=55 // pred_check
        %p638 = pneg %p194
      $region58: #{_lambda_.1} parent=55 // pred_check_branch
        %640 = sbr.rel (%p638) target = $region60
      $region59: #{_lambda_.1} parent=55 // pred_region
        %s641 = smul.u32 3, %s19
        %p642 = scmp.lt.s32.totalorder %s641, 5
        %s643 = scalar_select %p642, %s641, 5
        %s644 = smul.addr %s643, 8
        %s645 = scalar_lea.vmem %s7, %s644
      $region60: #{_lambda_.1} parent=55 // pred_fallthru
        _
    $region56: #{_lambda_.1} parent=5 // pred_fallthru
      _
  $region6: #{_lambda_.1} parent=0 // loop_footer
    %s17 = sadd.s32 1, %s13
  $region7: #{_lambda_.1} parent=0 // loop_footer_branch
    %12 = sbr.rel target = $region3
  $region8: #{_lambda_.1} parent=0 // loop_exit
    _

</llo_original>
